<compile_context>
chip_gen: v6e
topology: v6e:2x2x1
jax: 0.10.0
libtpu: 0.0.40
codegen_flags: <defaults>
</compile_context>

<pallas_src>
import jax
import jax.numpy as jnp
from jax.experimental import pallas as pl
from jax.experimental.pallas import tpu as pltpu

BN_EPS = 1e-5
_X_RESIDENT_BYTES = 8 << 20   # keep the whole-F x block resident below this


def _round_up(n, m):
    return ((n + m - 1) // m) * m


def _linear_unit_kernel(x_ref, w_ref, gb_ref, o_ref):
    # grid = (d_tiles ["parallel"], k_tiles [reduction, last, "arbitrary"]).
    # o_ref's block index is constant in k -> it is the resident f32 accumulator.
    k = pl.program_id(1)
    tk = w_ref.shape[0]

    @pl.when(k == 0)
    def _():
        o_ref[...] = jnp.zeros_like(o_ref)

    if x_ref.shape[1] == tk:
        # x block streams with k (or there is a single full-extent K block).
        x = x_ref[...]
    else:
        # Whole (padded) F extent of x is resident; slice the current K chunk.
        x = x_ref[:, pl.ds(pl.multiple_of(k * tk, 128), tk)]

    # Linear, no bias (exactly cancelled by training-mode BN mean subtraction).
    # bf16 MXU operands, f32 accumulation directly into the output block.
    o_ref[...] += jnp.dot(x.astype(jnp.bfloat16), w_ref[...],
                          preferred_element_type=jnp.float32)

    @pl.when(k == pl.num_programs(1) - 1)
    def _():
        y = o_ref[...]                                        # (B, tn) f32
        inv_b = 1.0 / y.shape[0]
        # Two-pass batch statistics on data already in VMEM (pure VALU work,
        # free in this HBM-bound regime); biased variance as training-mode BN.
        mean = jnp.sum(y, axis=0, keepdims=True) * inv_b      # (1, tn)
        d = y - mean
        var = jnp.sum(d * d, axis=0, keepdims=True) * inv_b
        gb = gb_ref[...]                                      # (2, tn) = [gamma; beta]
        scale = gb[0:1, :] * jax.lax.rsqrt(var + BN_EPS)      # rsqrt -> EUP slot
        o_ref[...] = jnp.maximum(d * scale + gb[1:2, :], 0.0).astype(o_ref.dtype)


def prepare_linear_unit_params(w_t, gamma, beta, *, tk=2048, tn=512):
    """One-time parameter preparation -- call at setup time, NOT per forward.

    w_t: (F, D) = Linear.weight.T;  gamma/beta: (D,) BatchNorm affine.
    The Linear bias is intentionally not an input: it is exactly cancelled by
    training-mode BatchNorm mean subtraction.  (Eval-mode / running-stats BN
    would NOT cancel it and is not what this kernel implements.)
    """
    F_in, D = w_t.shape
    assert gamma.shape == (D,) and beta.shape == (D,)

    # Tile choice: a full-extent block (legal for any size) when the dim fits
    # in one tile, otherwise 128-aligned tiles of a zero-padded extent.
    if F_in <= tk:
        tk, f_pad = F_in, F_in
    else:
        tk = _round_up(tk, 128)
        f_pad = _round_up(F_in, tk)
    if D <= tn:
        tn, d_pad = D, D
    else:
        tn = _round_up(tn, 128)
        d_pad = _round_up(D, tn)

    wp = w_t
    if (f_pad, d_pad) != (F_in, D):
        wp = jnp.pad(wp, ((0, f_pad - F_in), (0, d_pad - D)))
    wp = wp.astype(jnp.bfloat16)       # half the DMA bytes, bf16 MXU path

    g = gamma.astype(jnp.float32)
    b = beta.astype(jnp.float32)
    if d_pad != D:                     # zero-padded tail => padded lanes emit 0
        g = jnp.pad(g, (0, d_pad - D))
        b = jnp.pad(b, (0, d_pad - D))
    gb = jnp.stack([g, b])             # (2, d_pad): one DMA per D tile

    return {"w": wp, "gb": gb, "tk": tk, "tn": tn,
            "f_in": F_in, "d": D, "f_pad": f_pad, "d_pad": d_pad}


def linear_unit_forward(x, params):
    """x: (B, ...) flattened to (B, F).  params: from prepare_linear_unit_params."""
    w, gb = params["w"], params["gb"]
    tk, tn = params["tk"], params["tn"]
    F_in, D = params["f_in"], params["d"]
    f_pad, d_pad = params["f_pad"], params["d_pad"]

    B = x.shape[0]
    x2 = x.reshape(B, -1)
    assert x2.shape[1] == F_in
    if f_pad != F_in:                  # only when F does not fit a single tile
        x2 = jnp.pad(x2, ((0, 0), (0, f_pad - F_in)))

    d_tiles, k_tiles = d_pad // tn, f_pad // tk
    x_itemsize = jnp.dtype(x2.dtype).itemsize

    # Keep the whole F extent of x resident (constant index map -> fetched once,
    # never re-DMA'd per D tile) when it is small; otherwise stream K chunks.
    x_resident = (k_tiles == 1) or (B * f_pad * x_itemsize <= _X_RESIDENT_BYTES)
    if x_resident:
        x_spec = pl.BlockSpec((B, f_pad), lambda j, k: (0, 0))
        x_blk_bytes = B * f_pad * x_itemsize
    else:
        x_spec = pl.BlockSpec((B, tk), lambda j, k: (0, k))
        x_blk_bytes = B * tk * x_itemsize

    # Explicit scoped-VMEM budget from the actual (double-buffered) block sizes.
    # Needed for large tiles on v5e (16 MiB default scoped limit); capped below
    # v5e/v6e physical.  TODO(synk): for very large B the untiled batch axis
    # should switch to a two-pass (sum / sum-of-squares, then BN-apply) variant.
    vmem_need = 2 * (x_blk_bytes + tk * tn * 2 + 2 * tn * 4 + B * tn * 4)
    vmem_limit = int(min(max(vmem_need + (4 << 20), 32 << 20), 110 << 20))

    cost = pl.CostEstimate(
        flops=2 * B * f_pad * d_pad + 8 * B * d_pad,
        transcendentals=d_pad,                          # rsqrt per feature
        bytes_accessed=(x2.size * x_itemsize + w.size * 2 + gb.size * 4
                        + B * d_pad * 4),
    )

    out = pl.pallas_call(
        _linear_unit_kernel,
        out_shape=jax.ShapeDtypeStruct((B, d_pad), jnp.float32),
        grid_spec=pltpu.PrefetchScalarGridSpec(
            num_scalar_prefetch=0,
            grid=(d_tiles, k_tiles),
            in_specs=[
                x_spec,                                          # x
                pl.BlockSpec((tk, tn), lambda j, k: (k, j)),     # W: K x N tiles
                pl.BlockSpec((2, tn), lambda j, k: (0, j)),      # [gamma; beta]
            ],
            out_specs=pl.BlockSpec((B, tn), lambda j, k: (0, j)),
        ),
        compiler_params=pltpu.CompilerParams(
            # D-tile axis is independent ("parallel"; on v7x consider
            # pltpu.CORE_PARALLEL if a profile shows one idle TensorCore).
            # K is a reduction into the resident output block -> "arbitrary", last.
            dimension_semantics=("parallel", "arbitrary"),
            vmem_limit_bytes=vmem_limit,
        ),
        cost_estimate=cost,
    )(x2, w, gb)

    if d_pad != D:
        out = out[:, :D]
    return out


def _reference(x, w_t, b, gamma, beta):
    """Pure-JAX reference: Linear (with bias) + training-mode BN1d + ReLU.
    Operands rounded to bf16 to match the kernel's MXU operand precision."""
    B = x.shape[0]
    x2 = x.reshape(B, -1).astype(jnp.bfloat16).astype(jnp.float32)
    w = w_t.astype(jnp.bfloat16).astype(jnp.float32)
    y = x2 @ w + b
    mean = y.mean(axis=0, keepdims=True)
    var = ((y - mean) ** 2).mean(axis=0, keepdims=True)     # biased
    y_hat = (y - mean) / jnp.sqrt(var + BN_EPS)
    return jnp.maximum(gamma * y_hat + beta, 0.0)


if __name__ == "__main__":
    # Small shapes consistent with the module: x = (B, C, S) -> F = C*S.
    B, C, S = 8, 4, 16
    F_in = C * S          # in_dim = 64
    D = 32                # out_dim = 32

    key = jax.random.PRNGKey(0)
    kx, kw, kb = jax.random.split(key, 3)

    x = jax.random.normal(kx, (B, C, S), dtype=jnp.float32)

    # Deterministic PyTorch-like init (uniform bound 1/sqrt(in_dim)).
    bound = 1.0 / (F_in ** 0.5)
    w_t = jax.random.uniform(kw, (F_in, D), minval=-bound, maxval=bound,
                             dtype=jnp.float32)             # Linear weight^T
    b = jax.random.uniform(kb, (D,), minval=-bound, maxval=bound,
                           dtype=jnp.float32)               # Linear bias (ref only)
    gamma = jnp.ones((D,), dtype=jnp.float32)                # BN weight
    beta = jnp.zeros((D,), dtype=jnp.float32)                # BN bias

    params = prepare_linear_unit_params(w_t, gamma, beta)    # one-time setup
    out = linear_unit_forward(x, params)
    out = jax.block_until_ready(out)

    ref = _reference(x, w_t, b, gamma, beta)
    assert out.shape == (B, D)
    err = float(jnp.max(jnp.abs(out - ref)))
    assert jnp.allclose(out, ref, atol=1e-3, rtol=1e-3), err

    print("KERNEL_OK")
</pallas_src>

<mosaic_0001>
module attributes {stable_mosaic.version = 11 : i64} {
  func.func @_linear_unit_kernel(%arg0: i32, %arg1: i32, %arg2: memref<8x64xf32, #tpu.memory_space<vmem>>, %arg3: memref<64x32xbf16, #tpu.memory_space<vmem>>, %arg4: memref<2x32xf32, #tpu.memory_space<vmem>>, %arg5: memref<8x32xf32, #tpu.memory_space<vmem>>) attributes {dimension_semantics = [#tpu.dimension_semantics<parallel>, #tpu.dimension_semantics<arbitrary>], iteration_bounds = array<i64: 1, 1>, scalar_prefetch = 0 : i64, scratch_operands = 0 : i64, tpu.core_type = #tpu.core_type<tc>, window_params = [{pipeline_mode = #tpu.pipeline_mode<synchronous>, transform_indices = @transform_0, window_bounds = array<i64: 8, 64>}, {transform_indices = @transform_1, window_bounds = array<i64: 64, 32>}, {transform_indices = @transform_2, window_bounds = array<i64: 2, 32>}, {transform_indices = @transform_3, window_bounds = array<i64: 8, 32>}]} {
    %c0_i32 = arith.constant 0 : i32
    %0 = arith.cmpi eq, %arg1, %c0_i32 : i32
    %1 = arith.extui %0 : i1 to i32
    %c0_i32_0 = arith.constant 0 : i32
    %2 = arith.cmpi ne, %1, %c0_i32_0 : i32
    scf.if %2 {
      %cst_10 = arith.constant 0.000000e+00 : f32
      %13 = vector.broadcast %cst_10 : f32 to vector<8x32xf32>
      %c0_11 = arith.constant 0 : index
      %c0_12 = arith.constant 0 : index
      %14 = vector.load %arg5[%c0_11, %c0_12] : memref<8x32xf32, #tpu.memory_space<vmem>>, vector<8x32xf32>
      tpu.vector_store %arg5[%c0_11, %c0_12], %13 {strides = array<i32>} : memref<8x32xf32, #tpu.memory_space<vmem>>, vector<8x32xf32>,
    } else {
    }
    %c0 = arith.constant 0 : index
    %c0_1 = arith.constant 0 : index
    %3 = vector.load %arg2[%c0, %c0_1] : memref<8x64xf32, #tpu.memory_space<vmem>>, vector<8x64xf32>
    %c0_2 = arith.constant 0 : index
    %c0_3 = arith.constant 0 : index
    %4 = vector.load %arg5[%c0_2, %c0_3] : memref<8x32xf32, #tpu.memory_space<vmem>>, vector<8x32xf32>
    %5 = arith.truncf %3 : vector<8x64xf32> to vector<8x64xbf16>
    %c0_4 = arith.constant 0 : index
    %c0_5 = arith.constant 0 : index
    %6 = vector.load %arg3[%c0_4, %c0_5] : memref<64x32xbf16, #tpu.memory_space<vmem>>, vector<64x32xbf16>
    %cst = arith.constant dense<0.000000e+00> : vector<8x32xf32>
    %7 = tpu.matmul %5, %6, %cst {dimension_numbers = #tpu.dot_dimension_numbers<[1], [0], [0], [1], [0, 0, 1, 1], [], []>} : vector<8x64xbf16>, vector<64x32xbf16>, vector<8x32xf32> -> vector<8x32xf32>
    %8 = arith.addf %4, %7 : vector<8x32xf32>
    %c0_6 = arith.constant 0 : index
    %c0_7 = arith.constant 0 : index
    %9 = vector.load %arg5[%c0_6, %c0_7] : memref<8x32xf32, #tpu.memory_space<vmem>>, vector<8x32xf32>
    tpu.vector_store %arg5[%c0_6, %c0_7], %8 {strides = array<i32>} : memref<8x32xf32, #tpu.memory_space<vmem>>, vector<8x32xf32>,
    %c0_i32_8 = arith.constant 0 : i32
    %10 = arith.cmpi eq, %arg1, %c0_i32_8 : i32
    %11 = arith.extui %10 : i1 to i32
    %c0_i32_9 = arith.constant 0 : i32
    %12 = arith.cmpi ne, %11, %c0_i32_9 : i32
    scf.if %12 {
      %c0_10 = arith.constant 0 : index
      %c0_11 = arith.constant 0 : index
      %13 = vector.load %arg5[%c0_10, %c0_11] : memref<8x32xf32, #tpu.memory_space<vmem>>, vector<8x32xf32>
      %cst_12 = arith.constant dense<0.000000e+00> : vector<32xf32>
      %14 = vector.multi_reduction <add>, %13, %cst_12 [0] : vector<8x32xf32> to vector<32xf32>
      %15 = vector.shape_cast %14 : vector<32xf32> to vector<1x32xf32>
      %cst_13 = arith.constant 1.250000e-01 : f32
      %16 = vector.broadcast %cst_13 : f32 to vector<1x32xf32>
      %17 = arith.mulf %15, %16 : vector<1x32xf32>
      %18 = vector.broadcast %17 : vector<1x32xf32> to vector<8x32xf32>
      %19 = arith.subf %13, %18 : vector<8x32xf32>
      %20 = arith.mulf %19, %19 : vector<8x32xf32>
      %cst_14 = arith.constant dense<0.000000e+00> : vector<32xf32>
      %21 = vector.multi_reduction <add>, %20, %cst_14 [0] : vector<8x32xf32> to vector<32xf32>
      %22 = vector.shape_cast %21 : vector<32xf32> to vector<1x32xf32>
      %cst_15 = arith.constant 1.250000e-01 : f32
      %23 = vector.broadcast %cst_15 : f32 to vector<1x32xf32>
      %24 = arith.mulf %22, %23 : vector<1x32xf32>
      %c0_16 = arith.constant 0 : index
      %c0_17 = arith.constant 0 : index
      %25 = vector.load %arg4[%c0_16, %c0_17] : memref<2x32xf32, #tpu.memory_space<vmem>>, vector<2x32xf32>
      %26 = vector.extract_strided_slice %25 {offsets = [0, 0], sizes = [1, 32], strides = [1, 1]} : vector<2x32xf32> to vector<1x32xf32>
      %cst_18 = arith.constant 9.99999974E-6 : f32
      %27 = vector.broadcast %cst_18 : f32 to vector<1x32xf32>
      %28 = arith.addf %24, %27 : vector<1x32xf32>
      %29 = math.rsqrt %28 : vector<1x32xf32>
      %30 = arith.mulf %26, %29 : vector<1x32xf32>
      %31 = vector.broadcast %30 : vector<1x32xf32> to vector<8x32xf32>
      %32 = arith.mulf %19, %31 : vector<8x32xf32>
      %33 = vector.extract_strided_slice %25 {offsets = [1, 0], sizes = [1, 32], strides = [1, 1]} : vector<2x32xf32> to vector<1x32xf32>
      %34 = vector.broadcast %33 : vector<1x32xf32> to vector<8x32xf32>
      %35 = arith.addf %32, %34 : vector<8x32xf32>
      %cst_19 = arith.constant 0.000000e+00 : f32
      %36 = vector.broadcast %cst_19 : f32 to vector<8x32xf32>
      %37 = arith.maximumf %35, %36 : vector<8x32xf32>
      %c0_20 = arith.constant 0 : index
      %c0_21 = arith.constant 0 : index
      %38 = vector.load %arg5[%c0_20, %c0_21] : memref<8x32xf32, #tpu.memory_space<vmem>>, vector<8x32xf32>
      tpu.vector_store %arg5[%c0_20, %c0_21], %37 {strides = array<i32>} : memref<8x32xf32, #tpu.memory_space<vmem>>, vector<8x32xf32>,
    } else {
    }
    return
  }
  func.func @transform_0(%arg0: i32, %arg1: i32) -> (i32, i32) {
    %c0_i32 = arith.constant 0 : i32
    %c0_i32_0 = arith.constant 0 : i32
    %c0_i32_1 = arith.constant 0 : i32
    return %c0_i32, %c0_i32_0 : i32, i32
  }
  func.func @transform_1(%arg0: i32, %arg1: i32) -> (i32, i32) {
    %c0_i32 = arith.constant 0 : i32
    return %arg1, %arg0 : i32, i32
  }
  func.func @transform_2(%arg0: i32, %arg1: i32) -> (i32, i32) {
    %c0_i32 = arith.constant 0 : i32
    %c0_i32_0 = arith.constant 0 : i32
    return %c0_i32, %arg0 : i32, i32
  }
  func.func @transform_3(%arg0: i32, %arg1: i32) -> (i32, i32) {
    %c0_i32 = arith.constant 0 : i32
    %c0_i32_0 = arith.constant 0 : i32
    return %c0_i32, %arg0 : i32, i32
  }
}

</mosaic_0001>

<llo_original>
// kernel: tpu_custom_call.1
$region0: #{tpu_custom_call.1}
  #allocation0 [shape = 'u32[]', space=smem, size = 0x4, offset = 0x4, fixed_abs, tag = 'smem constant byte address 0x4 - core index']
  #allocation1 [shape = 'u32[144,128]{1,0:T(1,128)}', space=vmem, size = 0x12000, scoped, tag = 'internal scratch']
  %s0 = inlined_call_operand.vmem [shape: f32[8,64], index: 0, kind: input, shape index: {}]
  %s1 = inlined_call_operand.vmem [shape: bf16[64,32], index: 1, kind: input, shape index: {}]
  %s2 = inlined_call_operand.vmem [shape: f32[2,32], index: 2, kind: input, shape index: {}]
  %s3 = inlined_call_operand.hbm [shape: f32[8,32], index: 3, kind: output, shape index: {}]
  %s4 = sld [smem:[#allocation0]]
  $region30: #{tpu_custom_call.1} parent=0
    _
  %s6 = ssub.s32 1, %s4
  %s7 = scalar_select 0, %s6, %s4
  $region1: #{tpu_custom_call.1} parent=0
    #allocation2 [shape = 'u8[4096]{0}', space=vmem, size = 0x1000, scoped, tag = 'output window, operand 0, single buffered']
    #allocation3 [shape = 's32[1]{0}', space=sflag, size = 0x4, scoped, tag = 'scoped memory for tpu_custom_call.1']
    %8 = vsyncpa [#allocation3], 0
    // Predicated region
    $region2: #{tpu_custom_call.1} parent=1 // pred_check
      _
    $region3: #{tpu_custom_call.1} parent=1 // pred_check_branch
      %10 = sbr.rel (0) target = $region5
    $region4: #{tpu_custom_call.1} parent=1 // pred_region
      _
    $region5: #{tpu_custom_call.1} parent=1 // pred_fallthru
      _
    // Predicated region
    $region6: #{tpu_custom_call.1} parent=1 // pred_check
      _
    $region7: #{tpu_custom_call.1} parent=1 // pred_check_branch
      %12 = sbr.rel (0) target = $region9
    $region8: #{tpu_custom_call.1} parent=1 // pred_region
      _
    $region9: #{tpu_custom_call.1} parent=1 // pred_fallthru
      _
    // Predicated region
    $region10: #{tpu_custom_call.1} parent=1 // pred_check
      _
    $region11: #{tpu_custom_call.1} parent=1 // pred_check_branch
      %14 = sbr.rel (0) target = $region13
    $region12: #{tpu_custom_call.1} parent=1 // pred_region
      _
    $region13: #{tpu_custom_call.1} parent=1 // pred_fallthru
      _
    %p16 = scmp.eq.s32.totalorder 0, 0
    // Predicated region
    $region14: #{tpu_custom_call.1} parent=1 // pred_check
      %p17 = pneg %p16
    $region15: #{tpu_custom_call.1} parent=1 // pred_check_branch
      %19 = sbr.rel (%p17) target = $region17
    $region16: #{tpu_custom_call.1} parent=1 // pred_region
      %vm20 = vcmask 261120
      %21 = vst.msk [vmem:[#allocation2] sm:$0xff] %vm20, 0.0
    $region17: #{tpu_custom_call.1} parent=1 // pred_fallthru
      _
    %v22 = vld [vmem:[%s0] sm:$0xff]
    %v23 = vld [vmem:[#allocation2] sm:$0xff]
    %v24 = vpack.c.bf16 %v22, %v22
    %v25 = vld [vmem:[%s1] sm:$0xf]
    %v26 = vld [vmem:[%s1 + $0x4] sm:$0xf]
    %v27 = vld [vmem:[%s1 + $0x8] sm:$0xf]
    %v28 = vld [vmem:[%s1 + $0xc] sm:$0xf]
    %v29 = vld [vmem:[%s1 + $0x10] sm:$0xf]
    %v30 = vld [vmem:[%s1 + $0x14] sm:$0xf]
    %v31 = vld [vmem:[%s1 + $0x18] sm:$0xf]
    %v32 = vld [vmem:[%s1 + $0x1c] sm:$0xf]
    %v41 = vunpack.c.l.b16 %v25
    %v42 = vunpack.c.l.b16 %v26
    %v43 = vunpack.c.l.b16 %v27
    %v44 = vunpack.c.l.b16 %v28
    %v45 = vunpack.c.l.b16 %v29
    %v46 = vunpack.c.l.b16 %v30
    %v47 = vunpack.c.l.b16 %v31
    %v48 = vunpack.c.l.b16 %v32
    %v49 = vpack.c.b16 %v42, %v41
    %v50 = vpack.c.b16 %v44, %v43
    %v51 = vpack.c.b16 %v46, %v45
    %v52 = vpack.c.b16 %v48, %v47
    %vm57 = vcmask 523264
    %v59 = vsel %vm57, %v24, 0
    %61 = vmatprep.subr.bf16.mxu0 0
    %62 = vmatpush1.bf16.msra.mxu0 0
    %63 = vmatprep.subr.bf16.mxu0 0
    %64 = vmatpush1.bf16.msra.mxu0 0
    %65 = vmatprep.subr.bf16.mxu0 0
    %66 = vmatpush1.bf16.msra.mxu0 0
    %67 = vmatprep.subr.bf16.mxu0 0
    %68 = vmatpush1.bf16.msra.mxu0 0
    %69 = vmatprep.subr.bf16.mxu0 0
    %70 = vmatpush1.bf16.msra.mxu0 %v52
    %71 = vmatprep.subr.bf16.mxu0 0
    %72 = vmatpush1.bf16.msra.mxu0 %v51
    %73 = vmatprep.subr.bf16.mxu0 0
    %74 = vmatpush1.bf16.msra.mxu0 %v50
    %75 = vmatprep.subr.bf16.mxu0 0
    %76 = vmatpush1.bf16.msra.mxu0 %v49
    %77 = vmatprep.subr.bf16.mxu0 0
    %78 = vmatpush2.bf16.msra.mxu0 0
    %79 = vmatprep.subr.bf16.mxu0 0
    %80 = vmatpush2.bf16.msra.mxu0 0
    %81 = vmatprep.subr.bf16.mxu0 0
    %82 = vmatpush2.bf16.msra.mxu0 0
    %83 = vmatprep.subr.bf16.mxu0 0
    %84 = vmatpush2.bf16.msra.mxu0 0
    %85 = vmatprep.subr.bf16.mxu0 0
    %86 = vmatpush2.bf16.msra.mxu0 0
    %87 = vmatprep.subr.bf16.mxu0 0
    %88 = vmatpush2.bf16.msra.mxu0 0
    %89 = vmatprep.subr.bf16.mxu0 0
    %90 = vmatpush2.bf16.msra.mxu0 0
    %91 = vmatprep.subr.bf16.mxu0 0
    %92 = vmatpush2.bf16.msra.mxu0 0
    %93 = vmatprep.mubr.bf16.mxu0 0
    %94 = vmatmul.mubr.bf16.gmra.mxu0 %v59
    %v95 = vpop.f32.mrf.mxu0
    %v96 = vadd.f32 0.0, %v95
    %v97 = vpop.f32.mrf.mxu0
    %v98 = vpop.f32.mrf.mxu0
    %v99 = vpop.f32.mrf.mxu0
    %100 = vdwg.mxu0
    %v101 = vadd.f32 %v23, %v96
    %vm102 = vcmask 261120
    %103 = vst.msk [vmem:[#allocation2] sm:$0xff] %vm102, %v101
    // Predicated region
    $region18: #{tpu_custom_call.1} parent=1 // pred_check
      %p104 = pneg %p16
    $region19: #{tpu_custom_call.1} parent=1 // pred_check_branch
      %106 = sbr.rel (%p104) target = $region21
    $region20: #{tpu_custom_call.1} parent=1 // pred_region
      %v107 = vld [vmem:[#allocation2] sm:$0xff]
      %v108 = vsel %vm102, %v107, 0.0
      %v109 = vrot.slane %v108, 4
      %v110 = vadd.f32 %v108, %v109
      %v111 = vrot.slane %v110, 2
      %v112 = vadd.f32 %v110, %v111
      %v113 = vrot.slane %v112, 1
      %v114 = vadd.f32 %v112, %v113
      %v115 = vmul.f32 %v114, 0.125
      %v116 = vsub.f32 %v107, %v115
      %v117 = vmul.f32 %v116, %v116
      %v118 = vsel %vm102, %v117, 0.0
      %v119 = vrot.slane %v118, 4
      %v120 = vadd.f32 %v118, %v119
      %v121 = vrot.slane %v120, 2
      %v122 = vadd.f32 %v120, %v121
      %v123 = vrot.slane %v122, 1
      %v124 = vadd.f32 %v122, %v123
      %v125 = vmul.f32 %v124, 0.125
      %v126 = vld [vmem:[%s2] sm:$0x3]
      %v127 = vadd.f32 %v125, 1e-05
      %v128 = vrsqrt.pop %v127
      %v129 = vmul.f32 %v126, %v128
      %v130 = vlaneseq
      %v131 = vshrl.u32 %v130, 7
      %v132 = vsub.s32 0, %v131
      %v133 = vrot.slane %v129, %v132
      %v134 = vmul.f32 %v116, %v133
      %v135 = vlaneseq
      %v136 = vshrl.u32 %v135, 7
      %v137 = vsub.s32 1, %v136
      %v138 = vrot.slane %v126, %v137
      %v139 = vadd.f32 %v134, %v138
      %v140 = vmax.f32 %v139, 0.0
      %141 = vst.msk [vmem:[#allocation2] sm:$0xff] %vm102, %v140
    $region21: #{tpu_custom_call.1} parent=1 // pred_fallthru
      _
    // Predicated region
    $region22: #{tpu_custom_call.1} parent=1 // pred_check
      _
    $region23: #{tpu_custom_call.1} parent=1 // pred_check_branch
      %143 = sbr.rel (0) target = $region25
    $region24: #{tpu_custom_call.1} parent=1 // pred_region
      %s145 = ssub.s32 128, 128
      %146 = vsyncadd [#allocation3], %s145
      %s148 = sshll.u32 [#allocation2], 4
      %s149 = int_to_ptr.vmem [resolvable:$true] %s148
      %151 = dma.vmem_to_hbm [thread:$0]  %s149, 128, %s3, [#allocation3]
    $region25: #{tpu_custom_call.1} parent=1 // pred_fallthru
      _
    // Predicated region
    $region26: #{tpu_custom_call.1} parent=1 // pred_check
      _
    $region27: #{tpu_custom_call.1} parent=1 // pred_check_branch
      %153 = sbr.rel (0) target = $region29
    $region28: #{tpu_custom_call.1} parent=1 // pred_region
      %154 = dma.done [#allocation3], 128
    $region29: #{tpu_custom_call.1} parent=1 // pred_fallthru
      _
    %155 = vsyncpa [#allocation3], 1

</llo_original>
